<compile_context>
chip_gen: v7x
topology: tpu7x:2x2x1
jax: 0.10.0
libtpu: 0.0.40
codegen_flags: <defaults>
</compile_context>

<pallas_src>
import functools

import jax
import jax.numpy as jnp
from jax.experimental import pallas as pl
from jax.experimental.pallas import tpu as pltpu


def _round_up(n, m):
    return ((n + m - 1) // m) * m


def _pad2d(a, rows, cols):
    return jnp.pad(a, ((0, rows - a.shape[0]), (0, cols - a.shape[1])))


def mlp_kernel(x_ref, w1_ref, b1_ref, w2_ref, b2_ref, y_ref):
    # Layer 1: cast x to bf16 right before the dot (f32 MXU accumulation).
    x = x_ref[...].astype(jnp.bfloat16)
    z = jnp.dot(x, w1_ref[...], preferred_element_type=jnp.float32)
    z = z + b1_ref[...]                                   # f32 bias add (VPU)
    # sigmoid(z) = 1 / (1 + exp(-z)); exp on the EUP, approx reciprocal keeps
    # the divide off the VALU critical path.
    h = pl.reciprocal(1.0 + jnp.exp(-z), approx=True)
    # Layer 2.
    y = jnp.dot(h.astype(jnp.bfloat16), w2_ref[...],
                preferred_element_type=jnp.float32)
    y_ref[...] = (y + b2_ref[...]).astype(y_ref.dtype)    # bf16 store


def prepare_params(w1, b1, w2, b2):
    """One-time prep: lane-pad H/O to 128 and cast matmul weights to bf16.

    w1: (In, H); b1: (H,) or (1, H); w2: (H, O); b2: (O,) or (1, O).
    """
    In, H = w1.shape
    O = w2.shape[1]
    Hp = _round_up(H, 128)
    Op = _round_up(O, 128)
    w1_p = _pad2d(jnp.asarray(w1, jnp.float32), In, Hp).astype(jnp.bfloat16)
    w2_p = _pad2d(jnp.asarray(w2, jnp.float32).reshape(H, O), Hp, Op).astype(jnp.bfloat16)
    b1_p = _pad2d(jnp.asarray(b1, jnp.float32).reshape(1, H), 1, Hp)
    b2_p = _pad2d(jnp.asarray(b2, jnp.float32).reshape(1, O), 1, Op)
    return w1_p, b1_p, w2_p, b2_p


def _batch_tile(batch, block_b):
    """Batch tile: multiple of 8, <= block_b, and (for non-trivial batches)
    yielding >= 2 grid steps so v7x's two TensorCores both engage."""
    b8 = _round_up(batch, 8)
    if b8 <= 8:
        return b8
    return min(block_b, _round_up((b8 + 1) // 2, 8))


@functools.partial(jax.jit, static_argnames=("out_features", "block_b"))
def net_forward(x, w1_p, b1_p, w2_p, b2_p, *, out_features, block_b=512):
    """x: (B, In) f32; padded params from prepare_params().

    Returns (B, out_features) f32: sigmoid(x @ W1 + b1) @ W2 + b2.
    """
    B, In = x.shape
    assert w1_p.shape[0] == In
    Hp = w1_p.shape[1]
    Op = w2_p.shape[1]

    TB = _batch_tile(B, block_b)
    Bp = _round_up(B, TB)
    if Bp != B:  # pad the batch (sublane) axis only when the tile requires it
        x = jnp.pad(x, ((0, Bp - B), (0, 0)))

    y_p = pl.pallas_call(
        mlp_kernel,
        out_shape=jax.ShapeDtypeStruct((Bp, Op), jnp.bfloat16),
        grid_spec=pl.GridSpec(
            grid=(Bp // TB,),
            in_specs=[
                pl.BlockSpec((TB, In), lambda i: (i, 0)),   # x tile (f32, true In)
                pl.BlockSpec((In, Hp), lambda i: (0, 0)),   # W1 resident (bf16)
                pl.BlockSpec((1, Hp), lambda i: (0, 0)),    # b1 resident (f32)
                pl.BlockSpec((Hp, Op), lambda i: (0, 0)),   # W2 resident (bf16)
                pl.BlockSpec((1, Op), lambda i: (0, 0)),    # b2 resident (f32)
            ],
            out_specs=pl.BlockSpec((TB, Op), lambda i: (i, 0)),
        ),
        compiler_params=pltpu.CompilerParams(
            dimension_semantics=("parallel",)),
    )(x, w1_p, b1_p, w2_p, b2_p)

    # Slice off padding and upcast; fuses with downstream consumers under jit.
    return y_p[:B, :out_features].astype(jnp.float32)


if __name__ == "__main__":
    # Shapes implied by Net(input_sz, hidden_sz, out_sz).
    batch, input_sz, hidden_sz, out_sz = 8, 32, 64, 16

    key = jax.random.PRNGKey(0)
    kx, kw1, kb1, kw2, kb2 = jax.random.split(key, 5)

    # Deterministic synthetic parameters (PyTorch nn.Linear-style uniform init).
    x = jax.random.normal(kx, (batch, input_sz), dtype=jnp.float32)
    bound1 = 1.0 / jnp.sqrt(input_sz)
    w1 = jax.random.uniform(kw1, (input_sz, hidden_sz), jnp.float32, -bound1, bound1)
    b1 = jax.random.uniform(kb1, (1, hidden_sz), jnp.float32, -bound1, bound1)
    bound2 = 1.0 / jnp.sqrt(hidden_sz)
    w2 = jax.random.uniform(kw2, (hidden_sz, out_sz), jnp.float32, -bound2, bound2)
    b2 = jax.random.uniform(kb2, (1, out_sz), jnp.float32, -bound2, bound2)

    # One-time parameter prep (pad + bf16 cast), hoisted out of the forward path.
    w1_p, b1_p, w2_p, b2_p = prepare_params(w1, b1, w2, b2)

    def ref(xv):
        return jax.nn.sigmoid(xv @ w1 + b1) @ w2 + b2

    # Small-batch path (single grid step).
    y = net_forward(x, w1_p, b1_p, w2_p, b2_p, out_features=out_sz)
    jax.block_until_ready(y)
    assert y.shape == (batch, out_sz)
    # Tolerance covers intentional bf16 matmul operands / bf16 output / approx
    # reciprocal (f32 MXU accumulation throughout).
    assert jnp.allclose(y, ref(x), atol=3e-2, rtol=3e-2), (
        float(jnp.max(jnp.abs(y - ref(x)))))

    # Larger batch: exercises multi-step grid + batch padding of the last tile.
    xb = jax.random.normal(jax.random.PRNGKey(1), (300, input_sz), jnp.float32)
    yb = net_forward(xb, w1_p, b1_p, w2_p, b2_p, out_features=out_sz)
    jax.block_until_ready(yb)
    assert yb.shape == (300, out_sz)
    assert jnp.allclose(yb, ref(xb), atol=3e-2, rtol=3e-2), (
        float(jnp.max(jnp.abs(yb - ref(xb)))))

    print("KERNEL_OK")
</pallas_src>

<mosaic_0001>
module attributes {stable_mosaic.version = 11 : i64} {
  func.func @mlp_kernel(%arg0: i32, %arg1: memref<8x32xf32, #tpu.memory_space<vmem>>, %arg2: memref<32x128xbf16, #tpu.memory_space<vmem>>, %arg3: memref<1x128xf32, #tpu.memory_space<vmem>>, %arg4: memref<128x128xbf16, #tpu.memory_space<vmem>>, %arg5: memref<1x128xf32, #tpu.memory_space<vmem>>, %arg6: memref<8x128xbf16, #tpu.memory_space<vmem>>) attributes {dimension_semantics = [#tpu.dimension_semantics<parallel>], iteration_bounds = array<i64: 1>, scalar_prefetch = 0 : i64, scratch_operands = 0 : i64, tpu.core_type = #tpu.core_type<tc>, window_params = [{transform_indices = @transform_0, window_bounds = array<i64: 8, 32>}, {pipeline_mode = #tpu.pipeline_mode<synchronous>, transform_indices = @transform_1, window_bounds = array<i64: 32, 128>}, {pipeline_mode = #tpu.pipeline_mode<synchronous>, transform_indices = @transform_2, window_bounds = array<i64: 1, 128>}, {pipeline_mode = #tpu.pipeline_mode<synchronous>, transform_indices = @transform_3, window_bounds = array<i64: 128, 128>}, {pipeline_mode = #tpu.pipeline_mode<synchronous>, transform_indices = @transform_4, window_bounds = array<i64: 1, 128>}, {transform_indices = @transform_5, window_bounds = array<i64: 8, 128>}]} {
    %c0 = arith.constant 0 : index
    %c0_0 = arith.constant 0 : index
    %0 = vector.load %arg1[%c0, %c0_0] : memref<8x32xf32, #tpu.memory_space<vmem>>, vector<8x32xf32>
    %1 = arith.truncf %0 : vector<8x32xf32> to vector<8x32xbf16>
    %c0_1 = arith.constant 0 : index
    %c0_2 = arith.constant 0 : index
    %2 = vector.load %arg2[%c0_1, %c0_2] : memref<32x128xbf16, #tpu.memory_space<vmem>>, vector<32x128xbf16>
    %cst = arith.constant dense<0.000000e+00> : vector<8x128xf32>
    %3 = tpu.matmul %1, %2, %cst {dimension_numbers = #tpu.dot_dimension_numbers<[1], [0], [0], [1], [0, 0, 1, 1], [], []>} : vector<8x32xbf16>, vector<32x128xbf16>, vector<8x128xf32> -> vector<8x128xf32>
    %c0_3 = arith.constant 0 : index
    %c0_4 = arith.constant 0 : index
    %4 = vector.load %arg3[%c0_3, %c0_4] : memref<1x128xf32, #tpu.memory_space<vmem>>, vector<1x128xf32>
    %5 = vector.broadcast %4 : vector<1x128xf32> to vector<8x128xf32>
    %6 = arith.addf %3, %5 : vector<8x128xf32>
    %cst_5 = arith.constant 0.000000e+00 : f32
    %7 = vector.broadcast %cst_5 : f32 to vector<8x128xf32>
    %8 = arith.subf %7, %6 : vector<8x128xf32>
    %9 = math.exp %8 : vector<8x128xf32>
    %cst_6 = arith.constant 1.000000e+00 : f32
    %10 = vector.broadcast %cst_6 : f32 to vector<8x128xf32>
    %11 = arith.addf %10, %9 : vector<8x128xf32>
    %12 = tpu.reciprocal %11 {approx = true} : vector<8x128xf32> -> vector<8x128xf32>
    %13 = arith.truncf %12 : vector<8x128xf32> to vector<8x128xbf16>
    %c0_7 = arith.constant 0 : index
    %c0_8 = arith.constant 0 : index
    %14 = vector.load %arg4[%c0_7, %c0_8] : memref<128x128xbf16, #tpu.memory_space<vmem>>, vector<128x128xbf16>
    %cst_9 = arith.constant dense<0.000000e+00> : vector<8x128xf32>
    %15 = tpu.matmul %13, %14, %cst_9 {dimension_numbers = #tpu.dot_dimension_numbers<[1], [0], [0], [1], [0, 0, 1, 1], [], []>} : vector<8x128xbf16>, vector<128x128xbf16>, vector<8x128xf32> -> vector<8x128xf32>
    %c0_10 = arith.constant 0 : index
    %c0_11 = arith.constant 0 : index
    %16 = vector.load %arg5[%c0_10, %c0_11] : memref<1x128xf32, #tpu.memory_space<vmem>>, vector<1x128xf32>
    %17 = vector.broadcast %16 : vector<1x128xf32> to vector<8x128xf32>
    %18 = arith.addf %15, %17 : vector<8x128xf32>
    %19 = arith.truncf %18 : vector<8x128xf32> to vector<8x128xbf16>
    %c0_12 = arith.constant 0 : index
    %c0_13 = arith.constant 0 : index
    %20 = vector.load %arg6[%c0_12, %c0_13] : memref<8x128xbf16, #tpu.memory_space<vmem>>, vector<8x128xbf16>
    tpu.vector_store %arg6[%c0_12, %c0_13], %19 {strides = array<i32>} : memref<8x128xbf16, #tpu.memory_space<vmem>>, vector<8x128xbf16>,
    return
  }
  func.func @transform_0(%arg0: i32) -> (i32, i32) {
    %c0_i32 = arith.constant 0 : i32
    %c0_i32_0 = arith.constant 0 : i32
    return %arg0, %c0_i32 : i32, i32
  }
  func.func @transform_1(%arg0: i32) -> (i32, i32) {
    %c0_i32 = arith.constant 0 : i32
    %c0_i32_0 = arith.constant 0 : i32
    %c0_i32_1 = arith.constant 0 : i32
    return %c0_i32, %c0_i32_0 : i32, i32
  }
  func.func @transform_2(%arg0: i32) -> (i32, i32) {
    %c0_i32 = arith.constant 0 : i32
    %c0_i32_0 = arith.constant 0 : i32
    %c0_i32_1 = arith.constant 0 : i32
    return %c0_i32, %c0_i32_0 : i32, i32
  }
  func.func @transform_3(%arg0: i32) -> (i32, i32) {
    %c0_i32 = arith.constant 0 : i32
    %c0_i32_0 = arith.constant 0 : i32
    %c0_i32_1 = arith.constant 0 : i32
    return %c0_i32, %c0_i32_0 : i32, i32
  }
  func.func @transform_4(%arg0: i32) -> (i32, i32) {
    %c0_i32 = arith.constant 0 : i32
    %c0_i32_0 = arith.constant 0 : i32
    %c0_i32_1 = arith.constant 0 : i32
    return %c0_i32, %c0_i32_0 : i32, i32
  }
  func.func @transform_5(%arg0: i32) -> (i32, i32) {
    %c0_i32 = arith.constant 0 : i32
    %c0_i32_0 = arith.constant 0 : i32
    return %arg0, %c0_i32 : i32, i32
  }
}

</mosaic_0001>

<llo_original>
// kernel: net_forward.1
$region0: #{net_forward.1}
  #allocation0 [shape = 'u32[]', space=smem, size = 0x4, offset = 0x4, fixed_abs, tag = 'smem constant byte address 0x4 - core index']
  #allocation1 [shape = 'u32[144,128]{1,0:T(1,128)}', space=vmem, size = 0x12000, scoped, tag = 'internal scratch']
  %s0 = inlined_call_operand.hbm [shape: f32[8,32], index: 0, kind: input, shape index: {}]
  %s1 = inlined_call_operand.hbm [shape: bf16[32,128], index: 1, kind: input, shape index: {}]
  %s2 = inlined_call_operand.vmem [shape: f32[1,128], index: 2, kind: input, shape index: {}]
  %s3 = inlined_call_operand.hbm [shape: bf16[128,128], index: 3, kind: input, shape index: {}]
  %s4 = inlined_call_operand.vmem [shape: f32[1,128], index: 4, kind: input, shape index: {}]
  %s5 = inlined_call_operand.vmem [shape: bf16[8,128], index: 5, kind: output, shape index: {}]
  %s6 = sld [smem:[#allocation0]]
  $region42: #{net_forward.1} parent=0
    _
  %s8 = ssub.s32 1, %s6
  %s9 = scalar_select 0, %s8, %s6
  $region1: #{net_forward.1} parent=0
    #allocation2 [shape = 'u8[4096]{0}', space=vmem, size = 0x1000, scoped, tag = 'input window, operand 0, single buffered']
    #allocation3 [shape = 's32[1]{0}', space=sflag, size = 0x4, scoped, tag = 'scoped memory for net_forward.1']
    #allocation4 [shape = 'u8[8192]{0}', space=vmem, size = 0x2000, scoped, tag = 'input window, operand 1, single buffered']
    #allocation5 [shape = 's32[1]{0}', space=sflag, size = 0x4, scoped, tag = 'scoped memory for net_forward.1']
    #allocation6 [shape = 'u8[32768]{0}', space=vmem, size = 0x8000, scoped, tag = 'input window, operand 3, single buffered']
    %10 = vsyncpa [#allocation3], 0
    %11 = vsyncpa [#allocation5], 0
    // Predicated region
    $region2: #{net_forward.1} parent=1 // pred_check
      _
    $region3: #{net_forward.1} parent=1 // pred_check_branch
      %13 = sbr.rel (0) target = $region5
    $region4: #{net_forward.1} parent=1 // pred_region
      %s15 = ssub.s32 128, 128
      %16 = vsyncadd [#allocation3], %s15
      %s18 = sshll.u32 [#allocation2], 4
      %s19 = int_to_ptr.vmem [resolvable:$true] %s18
      %21 = dma.hbm_to_vmem [thread:$0]  %s0, 128, %s19, [#allocation3]
    $region5: #{net_forward.1} parent=1 // pred_fallthru
      _
    // Predicated region
    $region6: #{net_forward.1} parent=1 // pred_check
      _
    $region7: #{net_forward.1} parent=1 // pred_check_branch
      %23 = sbr.rel (0) target = $region9
    $region8: #{net_forward.1} parent=1 // pred_region
      %s25 = ssub.s32 256, 256
      %26 = vsyncadd [#allocation5], %s25
      %s27 = sshll.u32 [#allocation4], 4
      %s28 = int_to_ptr.vmem [resolvable:$true] %s27
      %33 = dma.hbm_to_vmem [thread:$0]  %s1, 256, %s28, [#allocation5], 64, 64, 4
    $region9: #{net_forward.1} parent=1 // pred_fallthru
      _
    // Predicated region
    $region10: #{net_forward.1} parent=1 // pred_check
      _
    $region11: #{net_forward.1} parent=1 // pred_check_branch
      %35 = sbr.rel (0) target = $region13
    $region12: #{net_forward.1} parent=1 // pred_region
      _
    $region13: #{net_forward.1} parent=1 // pred_fallthru
      _
    // Predicated region
    $region14: #{net_forward.1} parent=1 // pred_check
      _
    $region15: #{net_forward.1} parent=1 // pred_check_branch
      %37 = sbr.rel (0) target = $region17
    $region16: #{net_forward.1} parent=1 // pred_region
      %s39 = ssub.s32 1024, 1024
      %40 = vsyncadd [#allocation5], %s39
      %s41 = sshll.u32 [#allocation6], 4
      %s42 = int_to_ptr.vmem [resolvable:$true] %s41
      %47 = dma.hbm_to_vmem [thread:$0]  %s3, 1024, %s42, [#allocation5], 64, 64, 4
    $region17: #{net_forward.1} parent=1 // pred_fallthru
      _
    // Predicated region
    $region18: #{net_forward.1} parent=1 // pred_check
      _
    $region19: #{net_forward.1} parent=1 // pred_check_branch
      %49 = sbr.rel (0) target = $region21
    $region20: #{net_forward.1} parent=1 // pred_region
      _
    $region21: #{net_forward.1} parent=1 // pred_fallthru
      _
    // Predicated region
    $region22: #{net_forward.1} parent=1 // pred_check
      _
    $region23: #{net_forward.1} parent=1 // pred_check_branch
      %51 = sbr.rel (0) target = $region25
    $region24: #{net_forward.1} parent=1 // pred_region
      %52 = dma.done [#allocation3], 128
    $region25: #{net_forward.1} parent=1 // pred_fallthru
      _
    // Predicated region
    $region26: #{net_forward.1} parent=1 // pred_check
      _
    $region27: #{net_forward.1} parent=1 // pred_check_branch
      %54 = sbr.rel (0) target = $region29
    $region28: #{net_forward.1} parent=1 // pred_region
      %55 = dma.done [#allocation5], 256
    $region29: #{net_forward.1} parent=1 // pred_fallthru
      _
    // Predicated region
    $region30: #{net_forward.1} parent=1 // pred_check
      _
    $region31: #{net_forward.1} parent=1 // pred_check_branch
      %57 = sbr.rel (0) target = $region33
    $region32: #{net_forward.1} parent=1 // pred_region
      %58 = dma.done [#allocation5], 1024
    $region33: #{net_forward.1} parent=1 // pred_fallthru
      _
    %v60 = vld [vmem:[#allocation2] sm:$0xff]
    %v61 = vpack.c.bf16 %v60, %v60
    %v62 = vld [vmem:[#allocation4] sm:$0xf]
    %v63 = vld [vmem:[#allocation4 + $0x4] sm:$0xf]
    %v64 = vld [vmem:[#allocation4 + $0x8] sm:$0xf]
    %v65 = vld [vmem:[#allocation4 + $0xc] sm:$0xf]
    %v66 = vld [vmem:[%s2] sm:$0x1]
    %v68 = vlaneseq
    %v69 = vshrl.u32 %v68, 7
    %v70 = vsub.s32 0, %v69
    %v71 = vrot.slane %v66, %v70
    %v77 = vunpack.c.l.b16 %v62
    %v78 = vunpack.c.l.b16 %v63
    %v79 = vunpack.c.l.b16 %v64
    %v80 = vunpack.c.l.b16 %v65
    %v81 = vpack.c.b16 %v78, %v77
    %v82 = vpack.c.b16 %v80, %v79
    %vm85 = vcmask 261120
    %v87 = vsel %vm85, %v61, 0
    %89 = vmatprep.subr.bf16.mxu0 0
    %90 = vmatpush1.bf16.msra.mxu0 %v81
    %91 = vmatprep.subr.bf16.mxu0 0
    %92 = vmatpush1.bf16.msra.mxu0 %v82
    %93 = vmatprep.subr.bf16.mxu0 0
    %94 = vmatpush1.bf16.msra.mxu0 0
    %95 = vmatprep.subr.bf16.mxu0 0
    %96 = vmatpush1.bf16.msra.mxu0 0
    %97 = vmatprep.subr.bf16.mxu0 0
    %98 = vmatpush1.bf16.msra.mxu0 0
    %99 = vmatprep.subr.bf16.mxu0 0
    %100 = vmatpush1.bf16.msra.mxu0 0
    %101 = vmatprep.subr.bf16.mxu0 0
    %102 = vmatpush1.bf16.msra.mxu0 0
    %103 = vmatprep.subr.bf16.mxu0 0
    %104 = vmatpush1.bf16.msra.mxu0 0
    %105 = vmatprep.subr.bf16.mxu0 0
    %106 = vmatpush1.bf16.msra.mxu0 0
    %107 = vmatprep.subr.bf16.mxu0 0
    %108 = vmatpush1.bf16.msra.mxu0 0
    %109 = vmatprep.subr.bf16.mxu0 0
    %110 = vmatpush1.bf16.msra.mxu0 0
    %111 = vmatprep.subr.bf16.mxu0 0
    %112 = vmatpush1.bf16.msra.mxu0 0
    %113 = vmatprep.subr.bf16.mxu0 0
    %114 = vmatpush1.bf16.msra.mxu0 0
    %115 = vmatprep.subr.bf16.mxu0 0
    %116 = vmatpush1.bf16.msra.mxu0 0
    %117 = vmatprep.subr.bf16.mxu0 0
    %118 = vmatpush1.bf16.msra.mxu0 0
    %119 = vmatprep.subr.bf16.mxu0 0
    %120 = vmatpush1.bf16.msra.mxu0 0
    %121 = vmatprep.mubr.bf16.mxu0 0
    %122 = vmatmul.mubr.bf16.gmra.mrb[0].mxu0 %v87
    %v123 = vpop.f32.mrb[0].mxu0
    %v124 = vadd.f32 %v71, %v123
    %v125 = vpop.f32.mrb[0].mxu0
    %v126 = vpop.f32.mrb[0].mxu0
    %v127 = vpop.f32.mrb[0].mxu0
    %128 = vdwg.mxu0
    %v129 = vsub.f32 0.0, %v124
    %v130 = vmul.f32 %v129, 1.442695
    %v131 = vpow.pop %v130
    %v132 = vadd.f32 %v131, 1.0
    %v133 = vrcp.pop %v132
    %v134 = vpack.c.bf16 %v133, %v133
    %v135 = vld [vmem:[#allocation6] sm:$0xf]
    %v136 = vld [vmem:[#allocation6 + $0x4] sm:$0xf]
    %v137 = vld [vmem:[#allocation6 + $0x8] sm:$0xf]
    %v138 = vld [vmem:[#allocation6 + $0xc] sm:$0xf]
    %v139 = vld [vmem:[#allocation6 + $0x10] sm:$0xf]
    %v140 = vld [vmem:[#allocation6 + $0x14] sm:$0xf]
    %v141 = vld [vmem:[#allocation6 + $0x18] sm:$0xf]
    %v142 = vld [vmem:[#allocation6 + $0x1c] sm:$0xf]
    %v143 = vld [vmem:[#allocation6 + $0x20] sm:$0xf]
    %v144 = vld [vmem:[#allocation6 + $0x24] sm:$0xf]
    %v145 = vld [vmem:[#allocation6 + $0x28] sm:$0xf]
    %v146 = vld [vmem:[#allocation6 + $0x2c] sm:$0xf]
    %v147 = vld [vmem:[#allocation6 + $0x30] sm:$0xf]
    %v148 = vld [vmem:[#allocation6 + $0x34] sm:$0xf]
    %v149 = vld [vmem:[#allocation6 + $0x38] sm:$0xf]
    %v150 = vld [vmem:[#allocation6 + $0x3c] sm:$0xf]
    %v151 = vld [vmem:[%s4] sm:$0x1]
    %v153 = vlaneseq
    %v154 = vshrl.u32 %v153, 7
    %v155 = vsub.s32 0, %v154
    %v156 = vrot.slane %v151, %v155
    %v174 = vunpack.c.l.b16 %v135
    %v175 = vunpack.c.l.b16 %v136
    %v176 = vunpack.c.l.b16 %v137
    %v177 = vunpack.c.l.b16 %v138
    %v178 = vunpack.c.l.b16 %v139
    %v179 = vunpack.c.l.b16 %v140
    %v180 = vunpack.c.l.b16 %v141
    %v181 = vunpack.c.l.b16 %v142
    %v182 = vunpack.c.l.b16 %v143
    %v183 = vunpack.c.l.b16 %v144
    %v184 = vunpack.c.l.b16 %v145
    %v185 = vunpack.c.l.b16 %v146
    %v186 = vunpack.c.l.b16 %v147
    %v187 = vunpack.c.l.b16 %v148
    %v188 = vunpack.c.l.b16 %v149
    %v189 = vunpack.c.l.b16 %v150
    %v190 = vpack.c.b16 %v175, %v174
    %v191 = vpack.c.b16 %v177, %v176
    %v192 = vpack.c.b16 %v179, %v178
    %v193 = vpack.c.b16 %v181, %v180
    %v194 = vpack.c.b16 %v183, %v182
    %v195 = vpack.c.b16 %v185, %v184
    %v196 = vpack.c.b16 %v187, %v186
    %v197 = vpack.c.b16 %v189, %v188
    %206 = vmatprep.subr.bf16.mxu0 0
    %207 = vmatpush1.bf16.msra.mxu0 %v190
    %208 = vmatprep.subr.bf16.mxu0 0
    %209 = vmatpush1.bf16.msra.mxu0 %v191
    %210 = vmatprep.subr.bf16.mxu0 0
    %211 = vmatpush1.bf16.msra.mxu0 %v192
    %212 = vmatprep.subr.bf16.mxu0 0
    %213 = vmatpush1.bf16.msra.mxu0 %v193
    %214 = vmatprep.subr.bf16.mxu0 0
    %215 = vmatpush1.bf16.msra.mxu0 %v194
    %216 = vmatprep.subr.bf16.mxu0 0
    %217 = vmatpush1.bf16.msra.mxu0 %v195
    %218 = vmatprep.subr.bf16.mxu0 0
    %219 = vmatpush1.bf16.msra.mxu0 %v196
    %220 = vmatprep.subr.bf16.mxu0 0
    %221 = vmatpush1.bf16.msra.mxu0 %v197
    %222 = vmatprep.subr.bf16.mxu0 0
    %223 = vmatpush1.bf16.msra.mxu0 0
    %224 = vmatprep.subr.bf16.mxu0 0
    %225 = vmatpush1.bf16.msra.mxu0 0
    %226 = vmatprep.subr.bf16.mxu0 0
    %227 = vmatpush1.bf16.msra.mxu0 0
    %228 = vmatprep.subr.bf16.mxu0 0
    %229 = vmatpush1.bf16.msra.mxu0 0
    %230 = vmatprep.subr.bf16.mxu0 0
    %231 = vmatpush1.bf16.msra.mxu0 0
    %232 = vmatprep.subr.bf16.mxu0 0
    %233 = vmatpush1.bf16.msra.mxu0 0
    %234 = vmatprep.subr.bf16.mxu0 0
    %235 = vmatpush1.bf16.msra.mxu0 0
    %236 = vmatprep.subr.bf16.mxu0 0
    %237 = vmatpush1.bf16.msra.mxu0 0
    %238 = vmatprep.mubr.bf16.mxu0 0
    %239 = vmatmul.mubr.bf16.gmra.mrb[0].mxu0 %v134
    %v240 = vpop.f32.mrb[0].mxu0
    %v241 = vadd.f32 %v156, %v240
    %v242 = vpop.f32.mrb[0].mxu0
    %v243 = vpop.f32.mrb[0].mxu0
    %v244 = vpop.f32.mrb[0].mxu0
    %245 = vdwg.mxu0
    %v246 = vpack.c.bf16 %v241, %v241
    %247 = vst [vmem:[%s5] sm:$0xf] %v246
    // Predicated region
    $region34: #{net_forward.1} parent=1 // pred_check
      _
    $region35: #{net_forward.1} parent=1 // pred_check_branch
      %249 = sbr.rel (0) target = $region37
    $region36: #{net_forward.1} parent=1 // pred_region
      _
    $region37: #{net_forward.1} parent=1 // pred_fallthru
      _
    // Predicated region
    $region38: #{net_forward.1} parent=1 // pred_check
      _
    $region39: #{net_forward.1} parent=1 // pred_check_branch
      %251 = sbr.rel (0) target = $region41
    $region40: #{net_forward.1} parent=1 // pred_region
      _
    $region41: #{net_forward.1} parent=1 // pred_fallthru
      _
    %252 = vsyncpa [#allocation3], 1
    %253 = vsyncpa [#allocation5], 1

</llo_original>
